<compile_context>
chip_gen: v6e
topology: v6e:2x2x1
jax: 0.10.0
libtpu: 0.0.40
codegen_flags: <defaults>
</compile_context>

<pallas_src>
import functools

import jax
import jax.numpy as jnp
from jax.experimental import pallas as pl
from jax.experimental.pallas import tpu as pltpu

H1 = 512          # metric hidden 1
H2 = 128          # metric hidden 2
OUT_PAD = 128     # metric output, lane-padded 1 -> 128
LANE = 128
SUBLANE = 16      # bf16 sublane quantum
MAX_TILE_N = 512
VMEM_LIMIT = 48 * 1024 * 1024    # safe on v5e/v6e (128 MiB) and v7x (64 MiB)
VMEM_BUDGET = 40 * 1024 * 1024   # tile-selection budget (double-buffered estimate)


def _round_up(x, m):
    return (x + m - 1) // m * m


def _num_tensorcores():
    # Best-effort megacore detection (v7x has 2 TCs/chip). Falls back to 1.
    try:
        d = jax.devices()[0]
        nc = getattr(d, "num_cores", None)
        if nc:
            return int(nc)
        if "v7" in str(getattr(d, "device_kind", "")).lower():
            return 2
    except Exception:
        pass
    return 1


def _pick_tile_n(n, requested=None, min_tiles=1, max_tile_n=MAX_TILE_N):
    if requested is not None:
        return _round_up(requested, SUBLANE)
    n_min = _round_up(max(n, 1), SUBLANE)
    n_tiles = max(1, -(-n_min // max_tile_n))
    if min_tiles >= 2 and n_min >= 2 * SUBLANE:
        n_tiles = max(n_tiles, min_tiles)      # shard batch across TCs on megacore
    return _round_up(-(-n_min // n_tiles), SUBLANE)


def _largest_divisor_tile_k(k_pad, max_tk):
    units = k_pad // LANE
    best = 1
    for d in range(1, units + 1):
        if units % d == 0 and d * LANE <= max_tk:
            best = d
    return best * LANE


def _pick_tile_k(k_pad, tile_n, x_itemsize, out_cols, requested=None,
                 vmem_budget=VMEM_BUDGET):
    """Largest multiple-of-128 divisor of k_pad that fits the VMEM budget.

    Prefers full K (k_tiles == 1) so classifier weights stream from HBM only once
    per batch tile and no accumulator zero/finalize steps are needed.
    """
    if requested is not None:
        return _largest_divisor_tile_k(k_pad, max(LANE, _round_up(requested, LANE)))
    fixed = (tile_n * out_cols * 4 * 2 + tile_n * OUT_PAD * 4 * 2          # f32 outputs
             + 2 * 2 * (out_cols * H1 + H1 * H2 + H2 * OUT_PAD)            # metric W (bf16)
             + 2 * 4 * (out_cols + H1 + H2 + OUT_PAD))                     # biases (f32)
    per_k = tile_n * x_itemsize * 2 + out_cols * 2 * 2                     # x + W, 2 buffers
    max_tk = max(LANE, (vmem_budget - fixed) // per_k)
    return _largest_divisor_tile_k(k_pad, max_tk)


def _cost(n_pad, k_pad, out_cols, n_tiles, x_itemsize, metric):
    flops = 2 * n_pad * k_pad * out_cols
    w_bytes = n_tiles * k_pad * out_cols * 2
    out_bytes = n_pad * out_cols * 4
    if metric:
        flops += 2 * n_pad * (out_cols * H1 + H1 * H2 + H2 * OUT_PAD)
        w_bytes += 2 * (out_cols * H1 + H1 * H2 + H2 * OUT_PAD)
        out_bytes += n_pad * OUT_PAD * 4
    return pl.CostEstimate(flops=flops, transcendentals=0,
                           bytes_accessed=n_pad * k_pad * x_itemsize + w_bytes + out_bytes)


# ----------------------------------------------------------------------------
# Fused kernel: [student | teacher] classifier (one 256-wide matmul) + metric MLP.
# grid = (batch_tiles, k_tiles); K (reduction over in_dim) is the inner axis.
# The f32 st_out block revisits the same index across K, so it IS the accumulator.
# ----------------------------------------------------------------------------
def _fused_kernel(x_ref, w_st_ref, b_st_ref, w1_ref, b1_ref, w2_ref, b2_ref,
                  w3_ref, b3_ref, st_out_ref, score_out_ref):
    k = pl.program_id(1)

    @pl.when(k == 0)
    def _():
        st_out_ref[...] = jnp.zeros_like(st_out_ref)

    x = x_ref[...].astype(jnp.bfloat16)                       # in-kernel cast (VPU)
    st_out_ref[...] += jnp.dot(x, w_st_ref[...], preferred_element_type=jnp.float32)

    @pl.when(k == pl.num_programs(1) - 1)
    def _():
        st = st_out_ref[...] + b_st_ref[...]                  # biased [s | t] logits, f32
        st_out_ref[...] = st
        # Metric MLP on the VMEM-resident concatenated logits:
        # cat([s, t], -1) @ W1 is one (tile_n, 256) @ (256, 512) dot (padded lanes hit
        # zero weight rows, so they contribute nothing).
        z = st.astype(jnp.bfloat16)
        h = jnp.dot(z, w1_ref[...], preferred_element_type=jnp.float32) + b1_ref[...]
        h = jnp.maximum(h, 0.0).astype(jnp.bfloat16)
        h = jnp.dot(h, w2_ref[...], preferred_element_type=jnp.float32) + b2_ref[...]
        h = jnp.maximum(h, 0.0).astype(jnp.bfloat16)
        score_out_ref[...] = (
            jnp.dot(h, w3_ref[...], preferred_element_type=jnp.float32) + b3_ref[...])


# ----------------------------------------------------------------------------
# Student-only kernel (eval path): no teacher matmul, no metric MLP.
# ----------------------------------------------------------------------------
def _student_kernel(x_ref, w_ref, b_ref, out_ref):
    k = pl.program_id(1)

    @pl.when(k == 0)
    def _():
        out_ref[...] = jnp.zeros_like(out_ref)

    out_ref[...] += jnp.dot(x_ref[...].astype(jnp.bfloat16), w_ref[...],
                            preferred_element_type=jnp.float32)

    @pl.when(k == pl.num_programs(1) - 1)
    def _():
        out_ref[...] += b_ref[...]


def _prepare_x(feats, k_pad, tile_n):
    """Zero-pad only when needed; otherwise pass feats through untouched so the
    kernel reads it directly from HBM (no extra padded/bf16 copy round-trip)."""
    n, k_in = feats.shape
    n_pad = _round_up(max(n, 1), tile_n)
    if n_pad != n or k_pad != k_in:
        # Padded copy is unavoidable here; write it as bf16 to halve the extra bytes.
        x = jnp.pad(feats.astype(jnp.bfloat16), ((0, n_pad - n), (0, k_pad - k_in)))
    else:
        x = feats
    return x, n_pad


@functools.partial(jax.jit,
                   static_argnames=("num_classes", "tile_k", "tile_n", "min_batch_tiles"))
def fused_distill_forward(feats, params, *, num_classes, tile_k=None, tile_n=None,
                          min_batch_tiles=1):
    """Student + teacher classifiers and metric MLP in ONE pallas_call.

    feats:  [N, in_dim] float, flattened images.
    Returns (student_logits [N, C], teacher_logits [N, C], metric_score [N, 1]).
    """
    n, _ = feats.shape
    k_pad, c2 = params["w_st"].shape           # c2 == 2 * c_pad
    c_pad = c2 // 2

    tile_n_eff = _pick_tile_n(n, tile_n, min_batch_tiles)
    x, n_pad = _prepare_x(feats, k_pad, tile_n_eff)
    x_itemsize = jnp.dtype(x.dtype).itemsize
    tile_k_eff = _pick_tile_k(k_pad, tile_n_eff, x_itemsize, c2, requested=tile_k)

    n_tiles = n_pad // tile_n_eff
    k_tiles = k_pad // tile_k_eff

    grid_spec = pltpu.PrefetchScalarGridSpec(
        num_scalar_prefetch=0,
        grid=(n_tiles, k_tiles),
        in_specs=[
            pl.BlockSpec((tile_n_eff, tile_k_eff), lambda i, kk: (i, kk)),  # feats
            pl.BlockSpec((tile_k_eff, c2), lambda i, kk: (kk, 0)),          # [Ws | Wt]
            pl.BlockSpec((1, c2),          lambda i, kk: (0, 0)),           # [bs | bt]
            # Metric weights: constant index_map -> VMEM-resident across grid steps.
            # TODO(synk): pipeline_mode=pl.Buffered(1) would drop their second buffers.
            pl.BlockSpec((c2, H1),         lambda i, kk: (0, 0)),           # W1 (concat)
            pl.BlockSpec((1, H1),          lambda i, kk: (0, 0)),           # b1
            pl.BlockSpec((H1, H2),         lambda i, kk: (0, 0)),           # W2
            pl.BlockSpec((1, H2),          lambda i, kk: (0, 0)),           # b2
            pl.BlockSpec((H2, OUT_PAD),    lambda i, kk: (0, 0)),           # W3 (padded)
            pl.BlockSpec((1, OUT_PAD),     lambda i, kk: (0, 0)),           # b3
        ],
        out_specs=[
            pl.BlockSpec((tile_n_eff, c2),      lambda i, kk: (i, 0)),      # [s | t] logits
            pl.BlockSpec((tile_n_eff, OUT_PAD), lambda i, kk: (i, 0)),      # metric score
        ],
    )

    st_pad, sc_pad = pl.pallas_call(
        _fused_kernel,
        out_shape=(
            jax.ShapeDtypeStruct((n_pad, c2), jnp.float32),
            jax.ShapeDtypeStruct((n_pad, OUT_PAD), jnp.float32),
        ),
        grid_spec=grid_spec,
        compiler_params=pltpu.CompilerParams(
            dimension_semantics=("parallel", "arbitrary"),
            vmem_limit_bytes=VMEM_LIMIT),
        cost_estimate=_cost(n_pad, k_pad, c2, n_tiles, x_itemsize, metric=True),
    )(x, params["w_st"], params["b_st"], params["w1"], params["b1"],
      params["w2"], params["b2"], params["w3"], params["b3"])

    return (st_pad[:n, :num_classes],
            st_pad[:n, c_pad:c_pad + num_classes],
            sc_pad[:n, :1])


@functools.partial(jax.jit,
                   static_argnames=("num_classes", "tile_k", "tile_n", "min_batch_tiles"))
def student_forward(feats, w_s, b_s, *, num_classes, tile_k=None, tile_n=None,
                    min_batch_tiles=1):
    """Student classifier only (forward_test path): no teacher / metric compute."""
    n, _ = feats.shape
    k_pad, c_pad = w_s.shape

    tile_n_eff = _pick_tile_n(n, tile_n, min_batch_tiles)
    x, n_pad = _prepare_x(feats, k_pad, tile_n_eff)
    x_itemsize = jnp.dtype(x.dtype).itemsize
    tile_k_eff = _pick_tile_k(k_pad, tile_n_eff, x_itemsize, c_pad, requested=tile_k)

    n_tiles = n_pad // tile_n_eff
    k_tiles = k_pad // tile_k_eff

    grid_spec = pltpu.PrefetchScalarGridSpec(
        num_scalar_prefetch=0,
        grid=(n_tiles, k_tiles),
        in_specs=[
            pl.BlockSpec((tile_n_eff, tile_k_eff), lambda i, kk: (i, kk)),
            pl.BlockSpec((tile_k_eff, c_pad),      lambda i, kk: (kk, 0)),
            pl.BlockSpec((1, c_pad),               lambda i, kk: (0, 0)),
        ],
        out_specs=pl.BlockSpec((tile_n_eff, c_pad), lambda i, kk: (i, 0)),
    )

    out_pad = pl.pallas_call(
        _student_kernel,
        out_shape=jax.ShapeDtypeStruct((n_pad, c_pad), jnp.float32),
        grid_spec=grid_spec,
        compiler_params=pltpu.CompilerParams(
            dimension_semantics=("parallel", "arbitrary"),
            vmem_limit_bytes=VMEM_LIMIT),
        cost_estimate=_cost(n_pad, k_pad, c_pad, n_tiles, x_itemsize, metric=False),
    )(x, w_s, b_s)

    return out_pad[:n, :num_classes]


# ----------------------------------------------------------------------------
# Distiller (JAX/Pallas port of mdistiller/distillers/_base.py::Distiller)
# ----------------------------------------------------------------------------
class Distiller:
    def __init__(self, in_dim, num_classes=100, seed=0, tile_k=None):
        self.num_classes = num_classes
        self.in_dim = in_dim
        self.tile_k = tile_k                      # None -> auto (full K when it fits)

        k_pad = _round_up(in_dim, LANE)           # decoupled from tile_k
        c_pad = _round_up(num_classes, LANE)
        self.k_pad, self.c_pad = k_pad, c_pad
        self._min_batch_tiles = 2 if _num_tensorcores() >= 2 else 1

        key = jax.random.PRNGKey(seed)
        ks = jax.random.split(key, 10)

        def lin(kw, kb, fan_in, fan_out):
            # torch.nn.Linear default init: U(-1/sqrt(fan_in), 1/sqrt(fan_in)),
            # weight stored [in, out] (transpose of torch layout) so kernels do x @ W.
            bound = 1.0 / (fan_in ** 0.5)
            w = jax.random.uniform(kw, (fan_in, fan_out), jnp.float32, -bound, bound)
            b = jax.random.uniform(kb, (1, fan_out), jnp.float32, -bound, bound)
            return w, b

        # f32 "master" parameters (used by the pure-JAX reference).
        self.student_w, self.student_b = lin(ks[0], ks[1], in_dim, num_classes)
        self.teacher_w, self.teacher_b = lin(ks[2], ks[3], in_dim, num_classes)

        # metric = Sequential(Linear(2C,512), ReLU, Linear(512,128), ReLU, Linear(128,1))
        # (built when cfg.LEMMA.STRATEGY == 'optim' in the reference module).
        w1, b1 = lin(ks[4], ks[5], num_classes * 2, H1)
        w2, b2 = lin(ks[6], ks[7], H1, H2)
        w3, b3 = lin(ks[8], ks[9], H2, 1)
        self.metric = (w1, b1, w2, b2, w3, b3)

        # Lane/sublane zero-padded kernel parameters: weights bf16, biases f32.
        def padw(w, rows, cols):
            return jnp.pad(w, ((0, rows - w.shape[0]),
                               (0, cols - w.shape[1]))).astype(jnp.bfloat16)

        def padb(b, cols):
            return jnp.pad(b, ((0, 0), (0, cols - b.shape[1])))

        w_s_p = padw(self.student_w, k_pad, c_pad)
        w_t_p = padw(self.teacher_w, k_pad, c_pad)
        b_s_p = padb(self.student_b, c_pad)
        b_t_p = padb(self.teacher_b, c_pad)

        # Fused-kernel params: student/teacher concatenated along lanes -> one
        # 256-wide classifier matmul; metric W1 stacked to consume the concat.
        self.fused_params = {
            "w_st": jnp.concatenate([w_s_p, w_t_p], axis=1),        # (k_pad, 2*c_pad)
            "b_st": jnp.concatenate([b_s_p, b_t_p], axis=1),        # (1, 2*c_pad)
            "w1": jnp.concatenate([padw(w1[:num_classes], c_pad, H1),
                                   padw(w1[num_classes:], c_pad, H1)], axis=0),
            "b1": padb(b1, H1),
            "w2": padw(w2, H1, H2),
            "b2": padb(b2, H2),
            "w3": padw(w3, H2, OUT_PAD),
            "b3": padb(b3, OUT_PAD),
        }
        # Student-only params for the eval path.
        self.student_params = {"w_s": w_s_p, "b_s": b_s_p}

        self.update_teacher = False
        self.training = False   # eval mode: forward() dispatches to forward_test

    # --- fused Pallas pipeline: student logits, teacher logits, metric score ---
    def distill_step(self, image, tile_n=None):
        feats = image.reshape(image.shape[0], -1)              # torch.flatten(x, 1)
        return fused_distill_forward(feats, self.fused_params,
                                     num_classes=self.num_classes,
                                     tile_k=self.tile_k, tile_n=tile_n,
                                     min_batch_tiles=self._min_batch_tiles)

    # --- mirrors of the PyTorch module API ---
    def forward_train(self, **kwargs):
        raise NotImplementedError()               # abstract in the reference module

    def forward_test(self, image):
        # student(image)[0]: student-only kernel (no teacher / metric work).
        feats = image.reshape(image.shape[0], -1)
        return student_forward(feats, self.student_params["w_s"],
                               self.student_params["b_s"],
                               num_classes=self.num_classes,
                               tile_k=self.tile_k,
                               min_batch_tiles=self._min_batch_tiles)

    def forward(self, **kwargs):
        if self.training:
            return self.forward_train(**kwargs)
        return self.forward_test(kwargs["image"])


# ----------------------------------------------------------------------------
# Pure-JAX reference (mirrors the kernel's bf16-in / f32-accumulate casts)
# ----------------------------------------------------------------------------
def _bf(x):
    return x.astype(jnp.bfloat16).astype(jnp.float32)


def _ref_distill(image, d):
    feats = image.reshape(image.shape[0], -1)
    s = _bf(feats) @ _bf(d.student_w) + d.student_b
    t = _bf(feats) @ _bf(d.teacher_w) + d.teacher_b
    w1, b1, w2, b2, w3, b3 = d.metric
    z = jnp.concatenate([s, t], axis=-1)
    h = jnp.maximum(_bf(z) @ _bf(w1) + b1, 0.0)
    h = jnp.maximum(_bf(h) @ _bf(w2) + b2, 0.0)
    score = _bf(h) @ _bf(w3) + b3
    return s, t, score


if __name__ == "__main__":
    N, C, H, W = 2, 4, 16, 16
    NUM_CLASSES = 100   # cifar100

    key = jax.random.PRNGKey(0)
    image = jax.random.normal(key, (N, C, H, W), jnp.float32)   # layout: NCHW

    # tile_k=256 < in_dim=1024 so the K-accumulation grid path is exercised.
    distiller = Distiller(in_dim=C * H * W, num_classes=NUM_CLASSES, seed=0, tile_k=256)

    # Eval-mode forward: Distiller.forward(image=...) -> student(image)[0]
    logits = jax.block_until_ready(distiller.forward(image=image))
    assert logits.shape == (N, NUM_CLASSES)

    # Full fused distillation step: student/teacher logits + metric score, one kernel.
    s_logits, t_logits, score = jax.block_until_ready(distiller.distill_step(image))
    assert s_logits.shape == (N, NUM_CLASSES)
    assert t_logits.shape == (N, NUM_CLASSES)
    assert score.shape == (N, 1)

    ref_s, ref_t, ref_score = _ref_distill(image, distiller)
    assert jnp.allclose(logits, ref_s, atol=2e-2, rtol=2e-2)
    assert jnp.allclose(s_logits, ref_s, atol=2e-2, rtol=2e-2)
    assert jnp.allclose(t_logits, ref_t, atol=2e-2, rtol=2e-2)
    assert jnp.allclose(score, ref_score, atol=2e-2, rtol=2e-2)

    # Multiple batch tiles (tile_n=16 -> 3 batch tiles) with the same kernel.
    N2 = 40
    image2 = jax.random.normal(jax.random.PRNGKey(1), (N2, C, H, W), jnp.float32)
    s2, t2, sc2 = jax.block_until_ready(distiller.distill_step(image2, tile_n=16))
    r_s2, r_t2, r_sc2 = _ref_distill(image2, distiller)
    assert jnp.allclose(s2, r_s2, atol=2e-2, rtol=2e-2)
    assert jnp.allclose(t2, r_t2, atol=2e-2, rtol=2e-2)
    assert jnp.allclose(sc2, r_sc2, atol=2e-2, rtol=2e-2)

    # Non-128-multiple in_dim (K zero-padding path).
    C3, H3, W3 = 3, 15, 15
    dist3 = Distiller(in_dim=C3 * H3 * W3, num_classes=NUM_CLASSES, seed=2, tile_k=256)
    image3 = jax.random.normal(jax.random.PRNGKey(2), (5, C3, H3, W3), jnp.float32)
    s3, t3, sc3 = jax.block_until_ready(dist3.distill_step(image3))
    r_s3, r_t3, r_sc3 = _ref_distill(image3, dist3)
    assert jnp.allclose(s3, r_s3, atol=2e-2, rtol=2e-2)
    assert jnp.allclose(t3, r_t3, atol=2e-2, rtol=2e-2)
    assert jnp.allclose(sc3, r_sc3, atol=2e-2, rtol=2e-2)

    # Fully aligned case (N multiple of the sublane quantum, in_dim multiple of 128,
    # auto tiles): exercises the no-pad path where feats is streamed as-is (f32 read,
    # in-kernel bf16 cast) and tile_k == full K.
    dist4 = Distiller(in_dim=C * H * W, num_classes=NUM_CLASSES, seed=3)
    image4 = jax.random.normal(jax.random.PRNGKey(3), (64, C, H, W), jnp.float32)
    l4 = jax.block_until_ready(dist4.forward(image=image4))
    s4, t4, sc4 = jax.block_until_ready(dist4.distill_step(image4))
    r_s4, r_t4, r_sc4 = _ref_distill(image4, dist4)
    assert jnp.allclose(l4, r_s4, atol=2e-2, rtol=2e-2)
    assert jnp.allclose(s4, r_s4, atol=2e-2, rtol=2e-2)
    assert jnp.allclose(t4, r_t4, atol=2e-2, rtol=2e-2)
    assert jnp.allclose(sc4, r_sc4, atol=2e-2, rtol=2e-2)

    print("KERNEL_OK")
</pallas_src>

<mosaic_0001>
module attributes {stable_mosaic.version = 11 : i64} {
  func.func @_student_kernel(%arg0: i32, %arg1: i32, %arg2: memref<16x256xbf16, #tpu.memory_space<vmem>>, %arg3: memref<256x128xbf16, #tpu.memory_space<vmem>>, %arg4: memref<1x128xf32, #tpu.memory_space<vmem>>, %arg5: memref<16x128xf32, #tpu.memory_space<vmem>>) attributes {dimension_semantics = [#tpu.dimension_semantics<parallel>, #tpu.dimension_semantics<arbitrary>], iteration_bounds = array<i64: 1, 4>, scalar_prefetch = 0 : i64, scratch_operands = 0 : i64, tpu.core_type = #tpu.core_type<tc>, window_params = [{transform_indices = @transform_0, window_bounds = array<i64: 16, 256>}, {transform_indices = @transform_1, window_bounds = array<i64: 256, 128>}, {pipeline_mode = #tpu.pipeline_mode<synchronous>, transform_indices = @transform_2, window_bounds = array<i64: 1, 128>}, {transform_indices = @transform_3, window_bounds = array<i64: 16, 128>}]} {
    %c0_i32 = arith.constant 0 : i32
    %0 = arith.cmpi eq, %arg1, %c0_i32 : i32
    %1 = arith.extui %0 : i1 to i32
    %c0_i32_0 = arith.constant 0 : i32
    %2 = arith.cmpi ne, %1, %c0_i32_0 : i32
    scf.if %2 {
      %cst_9 = arith.constant 0.000000e+00 : f32
      %12 = vector.broadcast %cst_9 : f32 to vector<16x128xf32>
      %c0_10 = arith.constant 0 : index
      %c0_11 = arith.constant 0 : index
      %13 = vector.load %arg5[%c0_10, %c0_11] : memref<16x128xf32, #tpu.memory_space<vmem>>, vector<16x128xf32>
      tpu.vector_store %arg5[%c0_10, %c0_11], %12 {strides = array<i32>} : memref<16x128xf32, #tpu.memory_space<vmem>>, vector<16x128xf32>,
    } else {
    }
    %c0 = arith.constant 0 : index
    %c0_1 = arith.constant 0 : index
    %3 = vector.load %arg5[%c0, %c0_1] : memref<16x128xf32, #tpu.memory_space<vmem>>, vector<16x128xf32>
    %c0_2 = arith.constant 0 : index
    %c0_3 = arith.constant 0 : index
    %4 = vector.load %arg2[%c0_2, %c0_3] : memref<16x256xbf16, #tpu.memory_space<vmem>>, vector<16x256xbf16>
    %c0_4 = arith.constant 0 : index
    %c0_5 = arith.constant 0 : index
    %5 = vector.load %arg3[%c0_4, %c0_5] : memref<256x128xbf16, #tpu.memory_space<vmem>>, vector<256x128xbf16>
    %cst = arith.constant dense<0.000000e+00> : vector<16x128xf32>
    %6 = tpu.matmul %4, %5, %cst {dimension_numbers = #tpu.dot_dimension_numbers<[1], [0], [0], [1], [0, 0, 1, 1], [], []>} : vector<16x256xbf16>, vector<256x128xbf16>, vector<16x128xf32> -> vector<16x128xf32>
    %7 = arith.addf %3, %6 : vector<16x128xf32>
    %c0_6 = arith.constant 0 : index
    %c0_7 = arith.constant 0 : index
    %8 = vector.load %arg5[%c0_6, %c0_7] : memref<16x128xf32, #tpu.memory_space<vmem>>, vector<16x128xf32>
    tpu.vector_store %arg5[%c0_6, %c0_7], %7 {strides = array<i32>} : memref<16x128xf32, #tpu.memory_space<vmem>>, vector<16x128xf32>,
    %c3_i32 = arith.constant 3 : i32
    %9 = arith.cmpi eq, %arg1, %c3_i32 : i32
    %10 = arith.extui %9 : i1 to i32
    %c0_i32_8 = arith.constant 0 : i32
    %11 = arith.cmpi ne, %10, %c0_i32_8 : i32
    scf.if %11 {
      %c0_9 = arith.constant 0 : index
      %c0_10 = arith.constant 0 : index
      %12 = vector.load %arg5[%c0_9, %c0_10] : memref<16x128xf32, #tpu.memory_space<vmem>>, vector<16x128xf32>
      %c0_11 = arith.constant 0 : index
      %c0_12 = arith.constant 0 : index
      %13 = vector.load %arg4[%c0_11, %c0_12] : memref<1x128xf32, #tpu.memory_space<vmem>>, vector<1x128xf32>
      %14 = vector.broadcast %13 : vector<1x128xf32> to vector<16x128xf32>
      %15 = arith.addf %12, %14 : vector<16x128xf32>
      %c0_13 = arith.constant 0 : index
      %c0_14 = arith.constant 0 : index
      %16 = vector.load %arg5[%c0_13, %c0_14] : memref<16x128xf32, #tpu.memory_space<vmem>>, vector<16x128xf32>
      tpu.vector_store %arg5[%c0_13, %c0_14], %15 {strides = array<i32>} : memref<16x128xf32, #tpu.memory_space<vmem>>, vector<16x128xf32>,
    } else {
    }
    return
  }
  func.func @transform_0(%arg0: i32, %arg1: i32) -> (i32, i32) {
    %c0_i32 = arith.constant 0 : i32
    return %arg0, %arg1 : i32, i32
  }
  func.func @transform_1(%arg0: i32, %arg1: i32) -> (i32, i32) {
    %c0_i32 = arith.constant 0 : i32
    %c0_i32_0 = arith.constant 0 : i32
    return %arg1, %c0_i32 : i32, i32
  }
  func.func @transform_2(%arg0: i32, %arg1: i32) -> (i32, i32) {
    %c0_i32 = arith.constant 0 : i32
    %c0_i32_0 = arith.constant 0 : i32
    %c0_i32_1 = arith.constant 0 : i32
    return %c0_i32, %c0_i32_0 : i32, i32
  }
  func.func @transform_3(%arg0: i32, %arg1: i32) -> (i32, i32) {
    %c0_i32 = arith.constant 0 : i32
    %c0_i32_0 = arith.constant 0 : i32
    return %arg0, %c0_i32 : i32, i32
  }
}

</mosaic_0001>

<llo_original>
// kernel: student_forward.1
$region0: #{student_forward.1}
  #allocation0 [shape = 'u32[]', space=smem, size = 0x4, offset = 0x4, fixed_abs, tag = 'smem constant byte address 0x4 - core index']
  #allocation1 [shape = 'u32[144,128]{1,0:T(1,128)}', space=vmem, size = 0x12000, scoped, tag = 'internal scratch']
  %s0 = inlined_call_operand.vmem [shape: bf16[16,1024], index: 0, kind: input, shape index: {}]
  %s1 = inlined_call_operand.hbm [shape: bf16[1024,128], index: 1, kind: input, shape index: {}]
  %s2 = inlined_call_operand.vmem [shape: f32[1,128], index: 2, kind: input, shape index: {}]
  %s3 = inlined_call_operand.vmem [shape: f32[16,128], index: 3, kind: output, shape index: {}]
  %s4 = sld [smem:[#allocation0]]
  $region95: #{student_forward.1} parent=0
    _
  %s6 = ssub.s32 1, %s4
  %s7 = scalar_select 0, %s6, %s4
  $region1: #{student_forward.1} parent=0
    #allocation2 [shape = 'u8[16384]{0}', space=vmem, size = 0x4000, scoped, tag = 'input window, operand 0']
    #allocation3 [shape = 'u8[131072]{0}', space=vmem, size = 0x20000, scoped, tag = 'input window, operand 1']
    #allocation4 [shape = 's32[2]{0}', space=sflag, size = 0x8, scoped, tag = 'scoped memory for student_forward.1']
    %8 = vsyncpa [#allocation4], 0
    %s9 = scalar_lea.sflag [#allocation4], 1
    %10 = vsyncpa %s9, 0
    loop: start=0, step=1, limit=6
    $region2: #{student_forward.1} parent=1 // loop_pre_header
      _
    $region3: #{student_forward.1} parent=1 // loop_header
      %s12 = sphi 0, %s16
      %p13 = scmp.ge.s32.totalorder %s12, 6
      %s19 = sphi 0, %s31
      %s20 = sphi 0, %s27
      %s21 = sphi 0, %s19
      %s22 = sphi 0, %s20
      %s23 = sphi 0, %s21
      %s24 = sphi 0, %s22
      %s36 = sphi 0, %s38
      %s39 = sphi 0, %s36
      %s40 = sphi 0, %s39
      %s56 = sphi 0, %s40
      %s62 = sphi 0, %s64
      %s65 = sphi 0, %s62
      %s66 = sphi 0, %s65
      %s82 = sphi 0, %s66
      %s86 = sphi 0, %s86
      %s88 = sphi 0, %s86
      %s89 = sphi 0, %s88
      %s103 = sphi 0, %s89
      %s109 = sphi 0, %s111
      %s112 = sphi 0, %s109
      %s113 = sphi 0, %s112
      %s129 = sphi 0, %s113
    $region4: #{student_forward.1} parent=1 // loop_header_branch
      %15 = sbr.rel (%p13) target = $region8
    $region5: #{student_forward.1} parent=1 // loop_body
      %s17 = ssub.s32 %s12, 1
      %s18 = ssub.s32 %s12, 2
      %s25 = sadd.s32 1, %s20
      %p26 = scmp.ge.s32.totalorder %s25, 4
      %s27 = scalar_select %p26, 0, %s25
      %s28 = sadd.s32 1, %s19
      %s29 = scalar_select %p26, %s28, %s19
      %p30 = scmp.ge.s32.totalorder %s29, 1
      %s31 = scalar_select %p30, 0, %s29
      %s32 = ssub.s32 %s19, %s31
      %s33 = ssub.s32 %s20, %s27
      %s34 = sor.u32 %s32, %s33
      %p35 = scmp.eq.s32.totalorder %s34, 0
      %s37 = sadd.s32 %s36, 1
      %s38 = scalar_select %p35, %s36, %s37
      %p41 = pneg %p35
      %p42 = scmp.eq.s32.totalorder %s12, 3
      %p43 = por %p41, %p42
      %p44 = scmp.ne.s32.totalorder %s36, %s39
      %p45 = scmp.eq.s32.totalorder %s12, 0
      %p46 = por %p44, %p45
      %p47 = scmp.ne.s32.totalorder %s36, %s39
      %p48 = scmp.eq.s32.totalorder %s17, 3
      %p49 = por %p47, %p48
      %p50 = scmp.ne.s32.totalorder %s39, %s40
      %p51 = scmp.eq.s32.totalorder %s17, 0
      %p52 = por %p50, %p51
      %p53 = scmp.ne.s32.totalorder %s39, %s40
      %p54 = scmp.eq.s32.totalorder %s18, 3
      %p55 = por %p53, %p54
      %p57 = scmp.ne.s32.totalorder %s40, %s56
      %p58 = scmp.eq.s32.totalorder %s18, 0
      %p59 = por %p57, %p58
      %s60 = ssub.s32 %s20, %s27
      %p61 = scmp.eq.s32.totalorder %s60, 0
      %s63 = sadd.s32 %s62, 1
      %s64 = scalar_select %p61, %s62, %s63
      %p67 = pneg %p61
      %p68 = scmp.eq.s32.totalorder %s12, 3
      %p69 = por %p67, %p68
      %p70 = scmp.ne.s32.totalorder %s62, %s65
      %p71 = scmp.eq.s32.totalorder %s12, 0
      %p72 = por %p70, %p71
      %p73 = scmp.ne.s32.totalorder %s62, %s65
      %p74 = scmp.eq.s32.totalorder %s17, 3
      %p75 = por %p73, %p74
      %p76 = scmp.ne.s32.totalorder %s65, %s66
      %p77 = scmp.eq.s32.totalorder %s17, 0
      %p78 = por %p76, %p77
      %p79 = scmp.ne.s32.totalorder %s65, %s66
      %p80 = scmp.eq.s32.totalorder %s18, 3
      %p81 = por %p79, %p80
      %p83 = scmp.ne.s32.totalorder %s66, %s82
      %p84 = scmp.eq.s32.totalorder %s18, 0
      %p85 = por %p83, %p84
      %s87 = sadd.s32 %s86, 1
      %p90 = scmp.eq.s32.totalorder %s12, 3
      %p91 = scmp.ne.s32.totalorder %s86, %s88
      %p92 = scmp.eq.s32.totalorder %s12, 0
      %p93 = por %p91, %p92
      %p94 = scmp.ne.s32.totalorder %s86, %s88
      %p95 = scmp.eq.s32.totalorder %s17, 3
      %p96 = por %p94, %p95
      %p97 = scmp.ne.s32.totalorder %s88, %s89
      %p98 = scmp.eq.s32.totalorder %s17, 0
      %p99 = por %p97, %p98
      %p100 = scmp.ne.s32.totalorder %s88, %s89
      %p101 = scmp.eq.s32.totalorder %s18, 3
      %p102 = por %p100, %p101
      %p104 = scmp.ne.s32.totalorder %s89, %s103
      %p105 = scmp.eq.s32.totalorder %s18, 0
      %p106 = por %p104, %p105
      %s107 = ssub.s32 %s19, %s31
      %p108 = scmp.eq.s32.totalorder %s107, 0
      %s110 = sadd.s32 %s109, 1
      %s111 = scalar_select %p108, %s109, %s110
      %p114 = pneg %p108
      %p115 = scmp.eq.s32.totalorder %s12, 3
      %p116 = por %p114, %p115
      %p117 = scmp.ne.s32.totalorder %s109, %s112
      %p118 = scmp.eq.s32.totalorder %s12, 0
      %p119 = por %p117, %p118
      %p120 = scmp.ne.s32.totalorder %s109, %s112
      %p121 = scmp.eq.s32.totalorder %s17, 3
      %p122 = por %p120, %p121
      %p123 = scmp.ne.s32.totalorder %s112, %s113
      %p124 = scmp.eq.s32.totalorder %s17, 0
      %p125 = por %p123, %p124
      %p126 = scmp.ne.s32.totalorder %s112, %s113
      %p127 = scmp.eq.s32.totalorder %s18, 3
      %p128 = por %p126, %p127
      %p130 = scmp.ne.s32.totalorder %s113, %s129
      %p131 = scmp.eq.s32.totalorder %s18, 0
      %p132 = por %p130, %p131
      %p133 = scmp.le.s32.totalorder 1, %s12
      %p134 = scmp.lt.s32.totalorder %s12, 5
      %p135 = pnand %p133, %p134
      %p136 = pneg %p135
      // Predicated region
      $region9: #{student_forward.1} parent=5 // pred_check
        _
      $region10: #{student_forward.1} parent=5 // pred_check_branch
        %138 = sbr.rel (%p135) target = $region12
      $region11: #{student_forward.1} parent=5 // pred_region
        %s139 = ssub.s32 %s12, 1
        // Predicated region
        $region13: #{student_forward.1} parent=11 // pred_check
          %p140 = pneg %p99
        $region14: #{student_forward.1} parent=11 // pred_check_branch
          %142 = sbr.rel (%p140) target = $region16
        $region15: #{student_forward.1} parent=11 // pred_region
          _
        $region16: #{student_forward.1} parent=11 // pred_fallthru
          _
      $region12: #{student_forward.1} parent=5 // pred_fallthru
        _
      %p143 = scmp.lt.s32.totalorder %s12, 4
      // Predicated region
      $region17: #{student_forward.1} parent=5 // pred_check
        %p144 = pneg %p143
      $region18: #{student_forward.1} parent=5 // pred_check_branch
        %146 = sbr.rel (%p144) target = $region20
      $region19: #{student_forward.1} parent=5 // pred_region
        // Predicated region
        $region21: #{student_forward.1} parent=19 // pred_check
          %p147 = pneg %p46
        $region22: #{student_forward.1} parent=19 // pred_check_branch
          %149 = sbr.rel (%p147) target = $region24
        $region23: #{student_forward.1} parent=19 // pred_region
          %s150 = sand.u32 %s36, 1
          %s151 = sand.u32 %s36, 1
          %s152 = smul.addr %s151, 16
          %s153 = scalar_lea.vmem [#allocation2], %s152
          %s154 = smul.u32 2, %s19
          %s155 = smul.u32 2, %s20
          %s156 = smul.addr %s154, 8
          %s157 = sadd.s32 %s155, %s156
          %s158 = smul.addr %s157, 4
          %s159 = scalar_lea.vmem %s0, %s158
          // Predicated region
          $region25: #{student_forward.1} parent=23 // pred_check
            _
          $region26: #{student_forward.1} parent=23 // pred_check_branch
            %161 = sbr.rel (0) target = $region28
          $region27: #{student_forward.1} parent=23 // pred_region
            // Predicated region
            $region29: #{student_forward.1} parent=27 // pred_check
              _
            $region30: #{student_forward.1} parent=27 // pred_check_branch
              %163 = sbr.rel (0) target = $region32
            $region31: #{student_forward.1} parent=27 // pred_region
              // Predicated region
              $region44: #{student_forward.1} parent=31 // pred_check
                _
              $region45: #{student_forward.1} parent=31 // pred_check_branch
                %181 = sbr.rel (0) target = $region47
              $region46: #{student_forward.1} parent=31 // pred_region
                loop: start=0, step=1, limit=1
                $region48: #{student_forward.1} parent=46 // loop_pre_header
                  _
                $region49: #{student_forward.1} parent=46 // loop_header
                  %s183 = sphi 0, %s187
                  %p184 = scmp.ge.s32.totalorder %s183, 1
                  %s188 = sphi %s159, %s159
                  %s189 = sphi %s153, %s153
                $region50: #{student_forward.1} parent=46 // loop_header_branch
                  %186 = sbr.rel (%p184) target = $region54
                $region51: #{student_forward.1} parent=46 // loop_body
                  %v190 = vld [vmem:[%s188] sm:$0xff]
                  %191 = vst [vmem:[%s189] sm:$0xff] %v190
                  %v192 = vld [vmem:[%s188 + $0x20] sm:$0xff]
                  %193 = vst [vmem:[%s189 + $0x8] sm:$0xff] %v192
                $region52: #{student_forward.1} parent=46 // loop_footer
                  %s187 = sadd.s32 1, %s183
                $region53: #{student_forward.1} parent=46 // loop_footer_branch
                  %182 = sbr.rel target = $region49
                $region54: #{student_forward.1} parent=46 // loop_exit
                  _
              $region47: #{student_forward.1} parent=31 // pred_fallthru
                _
              // Predicated region
              $region55: #{student_forward.1} parent=31 // pred_check
                _
              $region56: #{student_forward.1} parent=31 // pred_check_branch
                %195 = sbr.rel target = $region58
              $region57: #{student_forward.1} parent=31 // pred_region
                _
              $region58: #{student_forward.1} parent=31 // pred_fallthru
                _
            $region32: #{student_forward.1} parent=27 // pred_fallthru
              _
            // Predicated region
            $region33: #{student_forward.1} parent=27 // pred_check
              _
            $region34: #{student_forward.1} parent=27 // pred_check_branch
              %165 = sbr.rel target = $region36
            $region35: #{student_forward.1} parent=27 // pred_region
              %s167 = ssub.s32 256, 1
              loop: start=0, step=1, limit=1
              $region37: #{student_forward.1} parent=35 // loop_pre_header
                _
              $region38: #{student_forward.1} parent=35 // loop_header
                %s169 = sphi 0, %s173
                %p170 = scmp.ge.s32.totalorder %s169, 1
                %s174 = sphi %s159, %s159
                %s175 = sphi %s153, %s153
              $region39: #{student_forward.1} parent=35 // loop_header_branch
                %172 = sbr.rel (%p170) target = $region43
              $region40: #{student_forward.1} parent=35 // loop_body
                %v176 = vld [vmem:[%s174] sm:%s167]
                %177 = vst [vmem:[%s175] sm:%s167] %v176
                %v178 = vld [vmem:[%s174 + $0x20] sm:%s167]
                %179 = vst [vmem:[%s175 + $0x8] sm:%s167] %v178
              $region41: #{student_forward.1} parent=35 // loop_footer
                %s173 = sadd.s32 1, %s169
              $region42: #{student_forward.1} parent=35 // loop_footer_branch
                %168 = sbr.rel target = $region38
              $region43: #{student_forward.1} parent=35 // loop_exit
                _
            $region36: #{student_forward.1} parent=27 // pred_fallthru
              _
          $region28: #{student_forward.1} parent=23 // pred_fallthru
            _
          %196 = vnop
        $region24: #{student_forward.1} parent=19 // pred_fallthru
          _
        // Predicated region
        $region59: #{student_forward.1} parent=19 // pred_check
          %p197 = pneg %p72
        $region60: #{student_forward.1} parent=19 // pred_check_branch
          %199 = sbr.rel (%p197) target = $region62
        $region61: #{student_forward.1} parent=19 // pred_region
          %s200 = sand.u32 %s62, 1
          %s201 = scalar_lea.sflag [#allocation4], %s200
          %s202 = sand.u32 %s62, 1
          %s203 = smul.addr %s202, 128
          %s204 = scalar_lea.vmem [#allocation3], %s203
          %s205 = smul.u32 32, %s20
          %s207 = ssub.s32 2048, 2048
          %208 = vsyncadd %s201, %s207
          %s209 = smul.addr %s205, 64
          %s210 = scalar_lea.hbm %s1, %s209
          %s211 = sshll.u32 %s204, 4
          %s212 = int_to_ptr.vmem [resolvable:$true] %s211
          %217 = dma.hbm_to_vmem [thread:$0]  %s210, 2048, %s212, %s201, 64, 64, 4
        $region62: #{student_forward.1} parent=19 // pred_fallthru
          _
      $region20: #{student_forward.1} parent=5 // pred_fallthru
        _
      %p218 = scmp.le.s32.totalorder 1, %s12
      %p219 = scmp.lt.s32.totalorder %s12, 5
      %p220 = pnand %p218, %p219
      %p221 = pneg %p220
      // Predicated region
      $region63: #{student_forward.1} parent=5 // pred_check
        _
      $region64: #{student_forward.1} parent=5 // pred_check_branch
        %223 = sbr.rel (%p220) target = $region66
      $region65: #{student_forward.1} parent=5 // pred_region
        %s224 = ssub.s32 %s12, 1
        %s225 = sand.u32 %s39, 1
        %s226 = sand.u32 %s39, 1
        %s227 = smul.addr %s226, 16
        %s228 = scalar_lea.vmem [#allocation2], %s227
        // Predicated region
        $region67: #{student_forward.1} parent=65 // pred_check
          %p229 = pneg %p52
        $region68: #{student_forward.1} parent=65 // pred_check_branch
          %231 = sbr.rel (%p229) target = $region70
        $region69: #{student_forward.1} parent=65 // pred_region
          _
        $region70: #{student_forward.1} parent=65 // pred_fallthru
          _
        %s232 = sand.u32 %s65, 1
        %s233 = scalar_lea.sflag [#allocation4], %s232
        %s234 = sand.u32 %s65, 1
        %s235 = smul.addr %s234, 128
        %s236 = scalar_lea.vmem [#allocation3], %s235
        // Predicated region
        $region71: #{student_forward.1} parent=65 // pred_check
          %p237 = pneg %p78
        $region72: #{student_forward.1} parent=65 // pred_check_branch
          %239 = sbr.rel (%p237) target = $region74
        $region73: #{student_forward.1} parent=65 // pred_region
          %240 = dma.done %s233, 2048
        $region74: #{student_forward.1} parent=65 // pred_fallthru
          _
        %s241 = sand.u32 %s39, 1
        %s242 = sand.u32 %s39, 1
        %s243 = smul.addr %s242, 16
        %s244 = scalar_lea.vmem [#allocation2], %s243
        %p245 = pneg %p52
        %p246 = pneg %p49
        %s247 = sand.u32 %s65, 1
        %s248 = scalar_lea.sflag [#allocation4], %s247
        %s249 = sand.u32 %s65, 1
        %s250 = smul.addr %s249, 128
        %s251 = scalar_lea.vmem [#allocation3], %s250
        %p252 = pneg %p78
        %p253 = pneg %p75
        %p254 = pneg %p99
        %p255 = pneg %p96
        %p256 = pneg %p125
        %p257 = pneg %p122
        %s258 = smul.u32 2, %s21
        %p259 = scmp.lt.s32.totalorder %s258, 1
        %s260 = scalar_select %p259, %s258, 1
        %s261 = smul.addr %s260, 8
        %s262 = scalar_lea.vmem %s3, %s261
        %s263 = smul.u32 2, %s21
        %s264 = smul.u32 2, %s22
        %s265 = smul.u32 32, %s22
        %s266 = smul.u32 2, %s21
        %p267 = scmp.lt.s32.totalorder %s266, 1
        %s268 = scalar_select %p267, %s266, 1
        %s269 = smul.addr %s268, 8
        %s270 = scalar_lea.vmem %s3, %s269
        %s271 = smul.u32 2, %s21
        %p273 = scmp.eq.s32.totalorder %s22, 0
        // Predicated region
        $region75: #{student_forward.1} parent=65 // pred_check
          %p274 = pneg %p273
        $region76: #{student_forward.1} parent=65 // pred_check_branch
          %276 = sbr.rel (%p274) target = $region78
        $region77: #{student_forward.1} parent=65 // pred_region
          %277 = vst [vmem:[%s270] sm:$0xff] 0.0
          %278 = vst [vmem:[%s270 + $0x8] sm:$0xff] 0.0
        $region78: #{student_forward.1} parent=65 // pred_fallthru
          _
        %v279 = vld [vmem:[%s270] sm:$0xff]
        %v280 = vld [vmem:[%s270 + $0x8] sm:$0xff]
        %v281 = vld [vmem:[%s228] sm:$0xff]
        %v282 = vld [vmem:[%s228 + $0x8] sm:$0xff]
        %v283 = vld [vmem:[%s236] sm:$0xf]
        %v284 = vld [vmem:[%s236 + $0x4] sm:$0xf]
        %v285 = vld [vmem:[%s236 + $0x8] sm:$0xf]
        %v286 = vld [vmem:[%s236 + $0xc] sm:$0xf]
        %v287 = vld [vmem:[%s236 + $0x10] sm:$0xf]
        %v288 = vld [vmem:[%s236 + $0x14] sm:$0xf]
        %v289 = vld [vmem:[%s236 + $0x18] sm:$0xf]
        %v290 = vld [vmem:[%s236 + $0x1c] sm:$0xf]
        %v291 = vld [vmem:[%s236 + $0x20] sm:$0xf]
        %v292 = vld [vmem:[%s236 + $0x24] sm:$0xf]
        %v293 = vld [vmem:[%s236 + $0x28] sm:$0xf]
        %v294 = vld [vmem:[%s236 + $0x2c] sm:$0xf]
        %v295 = vld [vmem:[%s236 + $0x30] sm:$0xf]
        %v296 = vld [vmem:[%s236 + $0x34] sm:$0xf]
        %v297 = vld [vmem:[%s236 + $0x38] sm:$0xf]
        %v298 = vld [vmem:[%s236 + $0x3c] sm:$0xf]
        %v299 = vld [vmem:[%s236 + $0x40] sm:$0xf]
        %v300 = vld [vmem:[%s236 + $0x44] sm:$0xf]
        %v301 = vld [vmem:[%s236 + $0x48] sm:$0xf]
        %v302 = vld [vmem:[%s236 + $0x4c] sm:$0xf]
        %v303 = vld [vmem:[%s236 + $0x50] sm:$0xf]
        %v304 = vld [vmem:[%s236 + $0x54] sm:$0xf]
        %v305 = vld [vmem:[%s236 + $0x58] sm:$0xf]
        %v306 = vld [vmem:[%s236 + $0x5c] sm:$0xf]
        %v307 = vld [vmem:[%s236 + $0x60] sm:$0xf]
        %v308 = vld [vmem:[%s236 + $0x64] sm:$0xf]
        %v309 = vld [vmem:[%s236 + $0x68] sm:$0xf]
        %v310 = vld [vmem:[%s236 + $0x6c] sm:$0xf]
        %v311 = vld [vmem:[%s236 + $0x70] sm:$0xf]
        %v312 = vld [vmem:[%s236 + $0x74] sm:$0xf]
        %v313 = vld [vmem:[%s236 + $0x78] sm:$0xf]
        %v314 = vld [vmem:[%s236 + $0x7c] sm:$0xf]
        %v317 = vunpack.c.l.b16 %v281
        %v318 = vunpack.c.h.b16 %v281
        %v319 = vunpack.c.l.b16 %v282
        %v320 = vunpack.c.h.b16 %v282
        %v321 = vpack.c.b16 %v319, %v317
        %v322 = vpack.c.b16 %v320, %v318
        %v357 = vunpack.c.l.b16 %v283
        %v358 = vunpack.c.l.b16 %v284
        %v359 = vunpack.c.l.b16 %v285
        %v360 = vunpack.c.l.b16 %v286
        %v361 = vunpack.c.l.b16 %v287
        %v362 = vunpack.c.l.b16 %v288
        %v363 = vunpack.c.l.b16 %v289
        %v364 = vunpack.c.l.b16 %v290
        %v365 = vunpack.c.l.b16 %v291
        %v366 = vunpack.c.l.b16 %v292
        %v367 = vunpack.c.l.b16 %v293
        %v368 = vunpack.c.l.b16 %v294
        %v369 = vunpack.c.l.b16 %v295
        %v370 = vunpack.c.l.b16 %v296
        %v371 = vunpack.c.l.b16 %v297
        %v372 = vunpack.c.l.b16 %v298
        %v373 = vunpack.c.l.b16 %v299
        %v374 = vunpack.c.l.b16 %v300
        %v375 = vunpack.c.l.b16 %v301
        %v376 = vunpack.c.l.b16 %v302
        %v377 = vunpack.c.l.b16 %v303
        %v378 = vunpack.c.l.b16 %v304
        %v379 = vunpack.c.l.b16 %v305
        %v380 = vunpack.c.l.b16 %v306
        %v381 = vunpack.c.l.b16 %v307
        %v382 = vunpack.c.l.b16 %v308
        %v383 = vunpack.c.l.b16 %v309
        %v384 = vunpack.c.l.b16 %v310
        %v385 = vunpack.c.l.b16 %v311
        %v386 = vunpack.c.l.b16 %v312
        %v387 = vunpack.c.l.b16 %v313
        %v388 = vunpack.c.l.b16 %v314
        %v389 = vpack.c.b16 %v358, %v357
        %v390 = vpack.c.b16 %v360, %v359
        %v391 = vpack.c.b16 %v362, %v361
        %v392 = vpack.c.b16 %v364, %v363
        %v393 = vpack.c.b16 %v366, %v365
        %v394 = vpack.c.b16 %v368, %v367
        %v395 = vpack.c.b16 %v370, %v369
        %v396 = vpack.c.b16 %v372, %v371
        %v397 = vpack.c.b16 %v374, %v373
        %v398 = vpack.c.b16 %v376, %v375
        %v399 = vpack.c.b16 %v378, %v377
        %v400 = vpack.c.b16 %v380, %v379
        %v401 = vpack.c.b16 %v382, %v381
        %v402 = vpack.c.b16 %v384, %v383
        %v403 = vpack.c.b16 %v386, %v385
        %v404 = vpack.c.b16 %v388, %v387
        %421 = vmatprep.subr.bf16.mxu0 0
        %422 = vmatpush1.bf16.msra.mxu0 %v396
        %423 = vmatprep.subr.bf16.mxu0 0
        %424 = vmatpush1.bf16.msra.mxu0 %v395
        %425 = vmatprep.subr.bf16.mxu0 0
        %426 = vmatpush1.bf16.msra.mxu0 %v394
        %427 = vmatprep.subr.bf16.mxu0 0
        %428 = vmatpush1.bf16.msra.mxu0 %v393
        %429 = vmatprep.subr.bf16.mxu0 0
        %430 = vmatpush1.bf16.msra.mxu0 %v392
        %431 = vmatprep.subr.bf16.mxu0 0
        %432 = vmatpush1.bf16.msra.mxu0 %v391
        %433 = vmatprep.subr.bf16.mxu0 0
        %434 = vmatpush1.bf16.msra.mxu0 %v390
        %435 = vmatprep.subr.bf16.mxu0 0
        %436 = vmatpush1.bf16.msra.mxu0 %v389
        %437 = vmatprep.subr.bf16.mxu0 0
        %438 = vmatpush2.bf16.msra.mxu0 %v404
        %439 = vmatprep.subr.bf16.mxu0 0
        %440 = vmatpush2.bf16.msra.mxu0 %v403
        %441 = vmatprep.subr.bf16.mxu0 0
        %442 = vmatpush2.bf16.msra.mxu0 %v402
        %443 = vmatprep.subr.bf16.mxu0 0
        %444 = vmatpush2.bf16.msra.mxu0 %v401
        %445 = vmatprep.subr.bf16.mxu0 0
        %446 = vmatpush2.bf16.msra.mxu0 %v400
        %447 = vmatprep.subr.bf16.mxu0 0
        %448 = vmatpush2.bf16.msra.mxu0 %v399
        %449 = vmatprep.subr.bf16.mxu0 0
        %450 = vmatpush2.bf16.msra.mxu0 %v398
        %451 = vmatprep.subr.bf16.mxu0 0
        %452 = vmatpush2.bf16.msra.mxu0 %v397
        %453 = vmatprep.mubr.bf16.mxu0 %v322
        %454 = vmatmul.mubr.bf16.gmra.mxu0 %v321
        %v455 = vpop.f32.mrf.mxu0
        %v456 = vadd.f32 0.0, %v455
        %v457 = vpop.f32.mrf.mxu0
        %v458 = vpop.f32.mrf.mxu0
        %v459 = vadd.f32 0.0, %v458
        %v460 = vpop.f32.mrf.mxu0
        %461 = vdwg.mxu0
        %v462 = vadd.f32 %v279, %v456
        %v463 = vadd.f32 %v280, %v459
        %464 = vst [vmem:[%s270] sm:$0xff] %v462
        %465 = vst [vmem:[%s270 + $0x8] sm:$0xff] %v463
        %p466 = scmp.eq.s32.totalorder %s22, 3
        // Predicated region
        $region79: #{student_forward.1} parent=65 // pred_check
          %p467 = pneg %p466
        $region80: #{student_forward.1} parent=65 // pred_check_branch
          %469 = sbr.rel (%p467) target = $region82
        $region81: #{student_forward.1} parent=65 // pred_region
          %v470 = vld [vmem:[%s270] sm:$0xff]
          %v471 = vld [vmem:[%s270 + $0x8] sm:$0xff]
          %v472 = vld [vmem:[%s2] sm:$0x1]
          %v474 = vlaneseq
          %v475 = vshrl.u32 %v474, 7
          %v476 = vsub.s32 0, %v475
          %v477 = vrot.slane %v472, %v476
          %v479 = vadd.f32 %v470, %v477
          %v480 = vadd.f32 %v471, %v477
          %481 = vst [vmem:[%s270] sm:$0xff] %v479
          %482 = vst [vmem:[%s270 + $0x8] sm:$0xff] %v480
        $region82: #{student_forward.1} parent=65 // pred_fallthru
          _
        %s483 = smul.u32 2, %s21
        %p484 = scmp.lt.s32.totalorder %s483, 1
        %s485 = scalar_select %p484, %s483, 1
        %s486 = smul.addr %s485, 8
        %s487 = scalar_lea.vmem %s3, %s486
        // Predicated region
        $region83: #{student_forward.1} parent=65 // pred_check
          %p488 = pneg %p122
        $region84: #{student_forward.1} parent=65 // pred_check_branch
          %490 = sbr.rel (%p488) target = $region86
        $region85: #{student_forward.1} parent=65 // pred_region
          %s491 = smul.u32 2, %s21
        $region86: #{student_forward.1} parent=65 // pred_fallthru
          _
        // Predicated region
        $region87: #{student_forward.1} parent=65 // pred_check
          %p492 = pneg %p122
        $region88: #{student_forward.1} parent=65 // pred_check_branch
          %494 = sbr.rel (%p492) target = $region90
        $region89: #{student_forward.1} parent=65 // pred_region
          %s495 = smul.u32 2, %s21
          %p496 = scmp.lt.s32.totalorder %s495, 1
          %s497 = scalar_select %p496, %s495, 1
          %s498 = smul.addr %s497, 8
          %s499 = scalar_lea.vmem %s3, %s498
        $region90: #{student_forward.1} parent=65 // pred_fallthru
          _
      $region66: #{student_forward.1} parent=5 // pred_fallthru
        _
      %p500 = scmp.le.s32.totalorder 2, %s12
      // Predicated region
      $region91: #{student_forward.1} parent=5 // pred_check
        %p501 = pneg %p500
      $region92: #{student_forward.1} parent=5 // pred_check_branch
        %503 = sbr.rel (%p501) target = $region94
      $region93: #{student_forward.1} parent=5 // pred_region
        %s504 = ssub.s32 %s12, 2
      $region94: #{student_forward.1} parent=5 // pred_fallthru
        _
    $region6: #{student_forward.1} parent=1 // loop_footer
      %s16 = sadd.s32 1, %s12
    $region7: #{student_forward.1} parent=1 // loop_footer_branch
      %11 = sbr.rel target = $region3
    $region8: #{student_forward.1} parent=1 // loop_exit
      _
    %505 = vsyncpa [#allocation4], 1
    %s506 = scalar_lea.sflag [#allocation4], 1
    %507 = vsyncpa %s506, 1

</llo_original>
